<compile_context>
chip_gen: v5e
topology: v5e:2x2
jax: 0.10.0
libtpu: 0.0.40
codegen_flags: <defaults>
</compile_context>

<pallas_src>
import functools

import jax
import jax.numpy as jnp
from jax.experimental import pallas as pl
from jax.experimental.pallas import tpu as pltpu


def _step_math(x, h, w_ref, b_ref, input_size, out_dtype):
    """new_h = [x, h] @ W.T + b, with W kept in PyTorch (hid, in+hid) layout."""
    # Static, lane-aligned in-VMEM views of the fused weight (no copies).
    wx = w_ref[:, :input_size]        # (hid, in)
    wh = w_ref[:, input_size:]        # (hid, hid)
    dn = (((1,), (1,)), ((), ()))     # contract feature dims; no transpose copy
    acc = jax.lax.dot_general(x, wx, dn, preferred_element_type=jnp.float32)
    acc = acc + jax.lax.dot_general(h, wh, dn, preferred_element_type=jnp.float32)
    return (acc + b_ref[...]).astype(out_dtype)


# ----------------------------- single step (module's forward) ----------------

def rnn_cell_kernel(x_ref, h_ref, w_ref, b_ref, o_ref, *, input_size):
    o_ref[...] = _step_math(x_ref[...], h_ref[...], w_ref, b_ref,
                            input_size, o_ref.dtype)


def rnn_forward(x, h, weight, bias):
    """Single RNN step, matching the PyTorch module's forward.

    x:      (B, input_size)
    h:      (B, hidden_size)
    weight: (hidden_size, input_size + hidden_size)   [nn.Linear layout]
    bias:   (hidden_size,)
    returns new hidden: (B, hidden_size)
    """
    B, input_size = x.shape
    hidden_size = h.shape[1]
    b2d = bias.reshape(1, hidden_size)
    return pl.pallas_call(
        functools.partial(rnn_cell_kernel, input_size=input_size),
        out_shape=jax.ShapeDtypeStruct((B, hidden_size), x.dtype),
    )(x, h, weight, b2d)


# ----------------------------- fused recurrence over time --------------------

def rnn_seq_kernel(x_ref, h0_ref, w_ref, b_ref, h_ref, *, input_size):
    t = pl.program_id(0)

    @pl.when(t == 0)
    def _():
        h_ref[...] = h0_ref[...]          # hidden carried in resident out block

    h_ref[...] = _step_math(x_ref[0], h_ref[...], w_ref, b_ref,
                            input_size, h_ref.dtype)


def rnn_forward_seq(xs, h0, weight, bias):
    """Applies the cell over xs[t], t = 0..T-1, in ONE pallas_call.

    W, b and the hidden state stay VMEM-resident across the whole sequence
    (constant index_maps -> single DMA); only x is streamed per timestep.
    """
    T, B, input_size = xs.shape
    hidden_size = h0.shape[1]
    b2d = bias.reshape(1, hidden_size)
    # NOTE(v7x): for very large hidden sizes, budget the resident
    # (hid, in+hid) f32 weight against the 64 MiB VMEM (tile the contraction
    # axis or keep weights in bf16); at these shapes it is tiny.
    return pl.pallas_call(
        functools.partial(rnn_seq_kernel, input_size=input_size),
        out_shape=jax.ShapeDtypeStruct((B, hidden_size), h0.dtype),
        grid=(T,),
        in_specs=[
            pl.BlockSpec((1, B, input_size), lambda t: (t, 0, 0)),       # x[t]
            pl.BlockSpec((B, hidden_size), lambda t: (0, 0)),            # h0
            pl.BlockSpec((hidden_size, input_size + hidden_size),
                         lambda t: (0, 0)),                              # W (resident)
            pl.BlockSpec((1, hidden_size), lambda t: (0, 0)),            # b (resident)
        ],
        out_specs=pl.BlockSpec((B, hidden_size), lambda t: (0, 0)),
        compiler_params=pltpu.CompilerParams(
            dimension_semantics=("arbitrary",)),                         # recurrence
    )(xs, h0, weight, b2d)


if __name__ == "__main__":
    B = 8
    input_size = 128
    hidden_size = 128
    T = 6

    key = jax.random.PRNGKey(0)
    kx, kh, kw, kb, ks = jax.random.split(key, 5)

    x = jax.random.normal(kx, (B, input_size), dtype=jnp.float32)
    h = jax.random.normal(kh, (B, hidden_size), dtype=jnp.float32)
    xs = jax.random.normal(ks, (T, B, input_size), dtype=jnp.float32)

    # nn.Linear default init: uniform(-1/sqrt(fan_in), 1/sqrt(fan_in)).
    fan_in = input_size + hidden_size
    bound = 1.0 / jnp.sqrt(jnp.float32(fan_in))
    weight = jax.random.uniform(kw, (hidden_size, fan_in), dtype=jnp.float32,
                                minval=-bound, maxval=bound)
    bias = jax.random.uniform(kb, (hidden_size,), dtype=jnp.float32,
                              minval=-bound, maxval=bound)

    # --- single step (the module's forward) ---
    out = rnn_forward(x, h, weight, bias)
    out = jax.block_until_ready(out)
    ref = jnp.concatenate([x, h], axis=1) @ weight.T + bias
    assert out.shape == (B, hidden_size)
    assert jnp.allclose(out, ref, atol=1e-3, rtol=1e-3)

    # --- fused recurrence over T steps (iterated application of the forward) ---
    h_seq = rnn_forward_seq(xs, h, weight, bias)
    h_seq = jax.block_until_ready(h_seq)
    h_ref = h
    for t in range(T):
        h_ref = jnp.concatenate([xs[t], h_ref], axis=1) @ weight.T + bias
    assert h_seq.shape == (B, hidden_size)
    assert jnp.allclose(h_seq, h_ref, atol=1e-2, rtol=1e-2)

    # TODO(synk): depthDecay backward hook / grad_weight / grad_bias buffers are
    # training-time autograd bookkeeping with no forward-pass effect; not implemented.
    print("KERNEL_OK")
</pallas_src>

<mosaic_0001>
module attributes {stable_mosaic.version = 11 : i64} {
  func.func @rnn_cell_kernel(%arg0: memref<8x128xf32, #tpu.memory_space<vmem>>, %arg1: memref<8x128xf32, #tpu.memory_space<vmem>>, %arg2: memref<128x256xf32, #tpu.memory_space<vmem>>, %arg3: memref<1x128xf32, #tpu.memory_space<vmem>>, %arg4: memref<8x128xf32, #tpu.memory_space<vmem>>) attributes {dimension_semantics = [], scalar_prefetch = 0 : i64, scratch_operands = 0 : i64, tpu.core_type = #tpu.core_type<tc>} {
    %c0 = arith.constant 0 : index
    %c0_0 = arith.constant 0 : index
    %0 = vector.load %arg0[%c0, %c0_0] : memref<8x128xf32, #tpu.memory_space<vmem>>, vector<8x128xf32>
    %c0_1 = arith.constant 0 : index
    %c0_2 = arith.constant 0 : index
    %1 = vector.load %arg1[%c0_1, %c0_2] : memref<8x128xf32, #tpu.memory_space<vmem>>, vector<8x128xf32>
    %c0_3 = arith.constant 0 : index
    %c0_4 = arith.constant 0 : index
    %2 = vector.load %arg2[%c0_3, %c0_4] : memref<128x256xf32, #tpu.memory_space<vmem>>, vector<128x128xf32>
    %c0_5 = arith.constant 0 : index
    %c128 = arith.constant 128 : index
    %3 = vector.load %arg2[%c0_5, %c128] : memref<128x256xf32, #tpu.memory_space<vmem>>, vector<128x128xf32>
    %cst = arith.constant dense<0.000000e+00> : vector<8x128xf32>
    %4 = tpu.matmul %0, %2, %cst {dimension_numbers = #tpu.dot_dimension_numbers<[1], [1], [0], [0], [0, 0, 1, 0], [], []>} : vector<8x128xf32>, vector<128x128xf32>, vector<8x128xf32> -> vector<8x128xf32>
    %cst_6 = arith.constant dense<0.000000e+00> : vector<8x128xf32>
    %5 = tpu.matmul %1, %3, %cst_6 {dimension_numbers = #tpu.dot_dimension_numbers<[1], [1], [0], [0], [0, 0, 1, 0], [], []>} : vector<8x128xf32>, vector<128x128xf32>, vector<8x128xf32> -> vector<8x128xf32>
    %6 = arith.addf %4, %5 : vector<8x128xf32>
    %c0_7 = arith.constant 0 : index
    %c0_8 = arith.constant 0 : index
    %7 = vector.load %arg3[%c0_7, %c0_8] : memref<1x128xf32, #tpu.memory_space<vmem>>, vector<1x128xf32>
    %8 = vector.broadcast %7 : vector<1x128xf32> to vector<8x128xf32>
    %9 = arith.addf %6, %8 : vector<8x128xf32>
    %c0_9 = arith.constant 0 : index
    %c0_10 = arith.constant 0 : index
    %10 = vector.load %arg4[%c0_9, %c0_10] : memref<8x128xf32, #tpu.memory_space<vmem>>, vector<8x128xf32>
    tpu.vector_store %arg4[%c0_9, %c0_10], %9 {strides = array<i32>} : memref<8x128xf32, #tpu.memory_space<vmem>>, vector<8x128xf32>,
    return
  }
}

</mosaic_0001>

<llo_original>
// kernel: tpu_custom_call.1
$region0: #{tpu_custom_call.1}
  #allocation0 [shape = 'u32[]', space=smem, size = 0x4, offset = 0x4, fixed_abs, tag = 'smem constant byte address 0x4 - core index']
  #allocation1 [shape = 'u32[72,128]{1,0:T(1,128)}', space=vmem, size = 0x9000, scoped, tag = 'internal scratch']
  %s0 = inlined_call_operand.hbm [shape: f32[8,128], index: 0, kind: input, shape index: {}]
  %s1 = inlined_call_operand.hbm [shape: f32[8,128], index: 1, kind: input, shape index: {}]
  %s2 = inlined_call_operand.hbm [shape: f32[128,256], index: 2, kind: input, shape index: {}]
  %s3 = inlined_call_operand.vmem [shape: f32[1,128], index: 3, kind: input, shape index: {}]
  %s4 = inlined_call_operand.hbm [shape: f32[8,128], index: 4, kind: output, shape index: {}]
  %s5 = sld [smem:[#allocation0]]
  $region38: #{tpu_custom_call.1} parent=0
    _
  %s7 = ssub.s32 1, %s5
  %s8 = scalar_select 0, %s7, %s5
  $region1: #{tpu_custom_call.1} parent=0
    #allocation2 [shape = 'u8[4096]{0}', space=vmem, size = 0x1000, scoped, tag = 'input window, operand 0, single buffered']
    #allocation3 [shape = 's32[1]{0}', space=sflag, size = 0x4, scoped, tag = 'scoped memory for tpu_custom_call.1']
    #allocation4 [shape = 's32[1]{0}', space=sflag, size = 0x4, scoped, tag = 'scoped memory for tpu_custom_call.1']
    #allocation5 [shape = 'u8[4096]{0}', space=vmem, size = 0x1000, scoped, tag = 'input window, operand 1, single buffered']
    #allocation6 [shape = 's32[1]{0}', space=sflag, size = 0x4, scoped, tag = 'scoped memory for tpu_custom_call.1']
    #allocation7 [shape = 'u8[131072]{0}', space=vmem, size = 0x20000, scoped, tag = 'input window, operand 2, single buffered']
    #allocation8 [shape = 'u8[4096]{0}', space=vmem, size = 0x1000, scoped, tag = 'output window, operand 0, single buffered']
    %9 = vsyncpa [#allocation3], 0
    %10 = vsyncpa [#allocation6], 0
    %11 = vsyncpa [#allocation4], 0
    // Predicated region
    $region2: #{tpu_custom_call.1} parent=1 // pred_check
      _
    $region3: #{tpu_custom_call.1} parent=1 // pred_check_branch
      %13 = sbr.rel (0) target = $region5
    $region4: #{tpu_custom_call.1} parent=1 // pred_region
      %15 = vsyncadd [#allocation3], 0
      %s17 = sshll.u32 %s0, 4
      %s18 = int_to_ptr.hbm [resolvable:$true] %s17
      %s19 = sshll.u32 [#allocation2], 4
      %s20 = int_to_ptr.vmem [resolvable:$true] %s19
      %22 = dma.hbm_to_vmem [thread:$0]  %s18, 128, %s20, [#allocation3]
    $region5: #{tpu_custom_call.1} parent=1 // pred_fallthru
      _
    // Predicated region
    $region6: #{tpu_custom_call.1} parent=1 // pred_check
      _
    $region7: #{tpu_custom_call.1} parent=1 // pred_check_branch
      %24 = sbr.rel (0) target = $region9
    $region8: #{tpu_custom_call.1} parent=1 // pred_region
      %26 = vsyncadd [#allocation6], 0
      %s28 = sshll.u32 %s1, 4
      %s29 = int_to_ptr.hbm [resolvable:$true] %s28
      %s30 = sshll.u32 [#allocation5], 4
      %s31 = int_to_ptr.vmem [resolvable:$true] %s30
      %33 = dma.hbm_to_vmem [thread:$0]  %s29, 128, %s31, [#allocation6]
    $region9: #{tpu_custom_call.1} parent=1 // pred_fallthru
      _
    // Predicated region
    $region10: #{tpu_custom_call.1} parent=1 // pred_check
      _
    $region11: #{tpu_custom_call.1} parent=1 // pred_check_branch
      %35 = sbr.rel (0) target = $region13
    $region12: #{tpu_custom_call.1} parent=1 // pred_region
      %37 = vsyncadd [#allocation6], 0
      %s38 = sshll.u32 %s2, 4
      %s39 = int_to_ptr.hbm [resolvable:$true] %s38
      %s40 = sshll.u32 [#allocation7], 4
      %s41 = int_to_ptr.vmem [resolvable:$true] %s40
      %46 = dma.hbm_to_vmem [thread:$0]  %s39, 4096, %s41, [#allocation6], 256, 256, 16
    $region13: #{tpu_custom_call.1} parent=1 // pred_fallthru
      _
    // Predicated region
    $region14: #{tpu_custom_call.1} parent=1 // pred_check
      _
    $region15: #{tpu_custom_call.1} parent=1 // pred_check_branch
      %48 = sbr.rel (0) target = $region17
    $region16: #{tpu_custom_call.1} parent=1 // pred_region
      _
    $region17: #{tpu_custom_call.1} parent=1 // pred_fallthru
      _
    // Predicated region
    $region18: #{tpu_custom_call.1} parent=1 // pred_check
      _
    $region19: #{tpu_custom_call.1} parent=1 // pred_check_branch
      %50 = sbr.rel (0) target = $region21
    $region20: #{tpu_custom_call.1} parent=1 // pred_region
      %52 = dma.done [#allocation3], 128
    $region21: #{tpu_custom_call.1} parent=1 // pred_fallthru
      _
    // Predicated region
    $region22: #{tpu_custom_call.1} parent=1 // pred_check
      _
    $region23: #{tpu_custom_call.1} parent=1 // pred_check_branch
      %54 = sbr.rel (0) target = $region25
    $region24: #{tpu_custom_call.1} parent=1 // pred_region
      %56 = dma.done [#allocation6], 128
    $region25: #{tpu_custom_call.1} parent=1 // pred_fallthru
      _
    // Predicated region
    $region26: #{tpu_custom_call.1} parent=1 // pred_check
      _
    $region27: #{tpu_custom_call.1} parent=1 // pred_check_branch
      %58 = sbr.rel (0) target = $region29
    $region28: #{tpu_custom_call.1} parent=1 // pred_region
      %60 = dma.done [#allocation6], 4096
    $region29: #{tpu_custom_call.1} parent=1 // pred_fallthru
      _
    %v61 = vld [vmem:[#allocation2] sm:$0xff]
    %v62 = vld [vmem:[#allocation5] sm:$0xff]
    %v63 = vld [vmem:[#allocation7] sm:$0xff]
    %v64 = vld [vmem:[#allocation7 + $0x10] sm:$0xff]
    %v65 = vld [vmem:[#allocation7 + $0x20] sm:$0xff]
    %v66 = vld [vmem:[#allocation7 + $0x30] sm:$0xff]
    %v67 = vld [vmem:[#allocation7 + $0x40] sm:$0xff]
    %v68 = vld [vmem:[#allocation7 + $0x50] sm:$0xff]
    %v69 = vld [vmem:[#allocation7 + $0x60] sm:$0xff]
    %v70 = vld [vmem:[#allocation7 + $0x70] sm:$0xff]
    %v71 = vld [vmem:[#allocation7 + $0x80] sm:$0xff]
    %v72 = vld [vmem:[#allocation7 + $0x90] sm:$0xff]
    %v73 = vld [vmem:[#allocation7 + $0xa0] sm:$0xff]
    %v74 = vld [vmem:[#allocation7 + $0xb0] sm:$0xff]
    %v75 = vld [vmem:[#allocation7 + $0xc0] sm:$0xff]
    %v76 = vld [vmem:[#allocation7 + $0xd0] sm:$0xff]
    %v77 = vld [vmem:[#allocation7 + $0xe0] sm:$0xff]
    %v78 = vld [vmem:[#allocation7 + $0xf0] sm:$0xff]
    %v79 = vld [vmem:[#allocation7 + $0x8] sm:$0xff]
    %v80 = vld [vmem:[#allocation7 + $0x18] sm:$0xff]
    %v81 = vld [vmem:[#allocation7 + $0x28] sm:$0xff]
    %v82 = vld [vmem:[#allocation7 + $0x38] sm:$0xff]
    %v83 = vld [vmem:[#allocation7 + $0x48] sm:$0xff]
    %v84 = vld [vmem:[#allocation7 + $0x58] sm:$0xff]
    %v85 = vld [vmem:[#allocation7 + $0x68] sm:$0xff]
    %v86 = vld [vmem:[#allocation7 + $0x78] sm:$0xff]
    %v87 = vld [vmem:[#allocation7 + $0x88] sm:$0xff]
    %v88 = vld [vmem:[#allocation7 + $0x98] sm:$0xff]
    %v89 = vld [vmem:[#allocation7 + $0xa8] sm:$0xff]
    %v90 = vld [vmem:[#allocation7 + $0xb8] sm:$0xff]
    %v91 = vld [vmem:[#allocation7 + $0xc8] sm:$0xff]
    %v92 = vld [vmem:[#allocation7 + $0xd8] sm:$0xff]
    %v93 = vld [vmem:[#allocation7 + $0xe8] sm:$0xff]
    %v94 = vld [vmem:[#allocation7 + $0xf8] sm:$0xff]
    %95 = vmatpush.xpose.msra.mxu0 %v94
    %96 = vmatpush.xpose.msra.mxu0 %v93
    %97 = vmatpush.xpose.msra.mxu0 %v92
    %98 = vmatpush.xpose.msra.mxu0 %v91
    %99 = vmatpush.xpose.msra.mxu0 %v90
    %100 = vmatpush.xpose.msra.mxu0 %v89
    %101 = vmatpush.xpose.msra.mxu0 %v88
    %102 = vmatpush.xpose.msra.mxu0 %v87
    %103 = vmatpush.xpose.msra.mxu0 %v86
    %104 = vmatpush.xpose.msra.mxu0 %v85
    %105 = vmatpush.xpose.msra.mxu0 %v84
    %106 = vmatpush.xpose.msra.mxu0 %v83
    %107 = vmatpush.xpose.msra.mxu0 %v82
    %108 = vmatpush.xpose.msra.mxu0 %v81
    %109 = vmatpush.xpose.msra.mxu0 %v80
    %110 = vmatpush.xpose.msra.mxu0 %v79
    %111 = vmatmul.f32.gmra.mxu0 %v62
    %v112 = vpop.f32.mrf.mxu0
    %v113 = vadd.f32 0.0, %v112
    %114 = vdwg.mxu0
    %115 = vmatpush.xpose.msra.mxu0 %v78
    %116 = vmatpush.xpose.msra.mxu0 %v77
    %117 = vmatpush.xpose.msra.mxu0 %v76
    %118 = vmatpush.xpose.msra.mxu0 %v75
    %119 = vmatpush.xpose.msra.mxu0 %v74
    %120 = vmatpush.xpose.msra.mxu0 %v73
    %121 = vmatpush.xpose.msra.mxu0 %v72
    %122 = vmatpush.xpose.msra.mxu0 %v71
    %123 = vmatpush.xpose.msra.mxu0 %v70
    %124 = vmatpush.xpose.msra.mxu0 %v69
    %125 = vmatpush.xpose.msra.mxu0 %v68
    %126 = vmatpush.xpose.msra.mxu0 %v67
    %127 = vmatpush.xpose.msra.mxu0 %v66
    %128 = vmatpush.xpose.msra.mxu0 %v65
    %129 = vmatpush.xpose.msra.mxu0 %v64
    %130 = vmatpush.xpose.msra.mxu0 %v63
    %131 = vmatmul.f32.gmra.mxu0 %v61
    %v132 = vpop.f32.mrf.mxu0
    %v133 = vadd.f32 %v113, %v132
    %134 = vdwg.mxu0
    %v135 = vld [vmem:[%s3] sm:$0x1]
    %v137 = vperm.slane %v135, 0
    %v139 = vadd.f32 %v133, %v137
    %140 = vst [vmem:[#allocation8] sm:$0xff] %v139
    // Predicated region
    $region30: #{tpu_custom_call.1} parent=1 // pred_check
      _
    $region31: #{tpu_custom_call.1} parent=1 // pred_check_branch
      %142 = sbr.rel (0) target = $region33
    $region32: #{tpu_custom_call.1} parent=1 // pred_region
      %144 = vsyncadd [#allocation4], 0
      %s146 = sshll.u32 [#allocation8], 4
      %s147 = int_to_ptr.vmem [resolvable:$true] %s146
      %s148 = sshll.u32 %s4, 4
      %s149 = int_to_ptr.hbm [resolvable:$true] %s148
      %151 = dma.vmem_to_hbm [thread:$0]  %s147, 128, %s149, [#allocation4]
    $region33: #{tpu_custom_call.1} parent=1 // pred_fallthru
      _
    // Predicated region
    $region34: #{tpu_custom_call.1} parent=1 // pred_check
      _
    $region35: #{tpu_custom_call.1} parent=1 // pred_check_branch
      %153 = sbr.rel (0) target = $region37
    $region36: #{tpu_custom_call.1} parent=1 // pred_region
      %155 = dma.done [#allocation4], 128
    $region37: #{tpu_custom_call.1} parent=1 // pred_fallthru
      _
    %156 = vsyncpa [#allocation3], 1
    %157 = vsyncpa [#allocation6], 1
    %158 = vsyncpa [#allocation4], 1

</llo_original>
